<compile_context>
chip_gen: v5e
topology: v5e:2x2
jax: 0.10.0
libtpu: 0.0.40
codegen_flags: <defaults>
</compile_context>

<pallas_src>
import functools
import math

import jax
import jax.numpy as jnp
from jax import lax
from jax.experimental import pallas as pl
from jax.experimental.pallas import tpu as pltpu


@functools.lru_cache(maxsize=None)
def _vmem_limit_bytes():
    """Generation-aware scoped-VMEM budget: ~3/4 of physical, capped at 96 MiB.

    v5e/v6e (128 MiB physical) -> 96 MiB; v7x (64 MiB physical) -> 48 MiB.
    Falls back to 48 MiB (safe on every generation) if the query is unavailable.
    """
    try:
        cap = int(pltpu.get_tpu_info().vmem_capacity_bytes)
        return int(min(cap * 3 // 4, 96 * 1024 * 1024))
    except Exception:  # pragma: no cover - defensive, query should exist on TPU
        return 48 * 1024 * 1024


def _pick_tile(dim, target, *, lane=False):
    """Largest tile <= target (halving search) that divides `dim`, else `dim`.

    With lane=True the tile must additionally be a multiple of 128 unless it
    spans the full dim (Mosaic lane-tiling constraint for minor dims).
    TODO(synk): pad-and-mask ragged dims instead of falling back to a full-dim
                block (a very ragged Sk would currently become one big block).
    """
    t = min(target, dim)
    while t > 1 and dim % t != 0:
        t //= 2
    if dim % t != 0:
        return dim
    if lane and t != dim and t % 128 != 0:
        return dim
    return t


# ---------------------------------------------------------------------------
# Linear kernels:  o = x @ w[band].T + b      (w kept in torch (N, K) layout)
# ---------------------------------------------------------------------------

def _linear_flat_kernel(x_ref, w_ref, b_ref, o_ref):
    # Full-K contraction in one MXU pass: no reduction grid axis, no accumulator
    # revisits, no re-reads of x across the N axis beyond what pipelining needs.
    y = lax.dot_general(
        x_ref[...], w_ref[...],
        dimension_numbers=(((1,), (1,)), ((), ())),   # x @ w.T, torch layout
        preferred_element_type=jnp.float32)
    o_ref[...] = (y + b_ref[...]).astype(o_ref.dtype)


def _linear_acc_kernel(x_ref, w_ref, b_ref, o_ref, acc_ref):
    kk = pl.program_id(2)

    @pl.when(kk == 0)
    def _():
        acc_ref[...] = jnp.zeros(acc_ref.shape, acc_ref.dtype)

    acc_ref[...] += lax.dot_general(
        x_ref[...], w_ref[...],
        dimension_numbers=(((1,), (1,)), ((), ())),
        preferred_element_type=jnp.float32)

    @pl.when(kk == pl.num_programs(2) - 1)
    def _():
        o_ref[...] = (acc_ref[...] + b_ref[...]).astype(o_ref.dtype)


def _linear(x, w, bias, *, out_dim, w_row_offset=0, out_dtype=None,
            tile_m=512, tile_n=512, tile_k=None):
    """x: (M, K), w: (W_rows, K), bias: (out_dim,).

    Computes  x @ w[w_row_offset : w_row_offset + out_dim].T + bias.
    The row band of `w` is selected through the BlockSpec index_map, so the
    packed (3E, E) in_proj weight is used untouched (untouched bands are never
    DMA'd).
    """
    M, K = x.shape
    out_dtype = x.dtype if out_dtype is None else out_dtype
    tm = _pick_tile(M, tile_m)
    tn = _pick_tile(out_dim, tile_n, lane=True)
    assert out_dim % tn == 0 and w_row_offset % tn == 0, (out_dim, w_row_offset, tn)
    n_off = w_row_offset // tn
    bias2 = bias.reshape(1, out_dim)
    vmem = _vmem_limit_bytes()

    if tile_k is None:
        # Flat (no reduction axis) whenever the full-K slab comfortably fits VMEM.
        tile_k = K if K <= 2048 else 512

    if tile_k >= K:
        return pl.pallas_call(
            _linear_flat_kernel,
            out_shape=jax.ShapeDtypeStruct((M, out_dim), out_dtype),
            grid=(M // tm, out_dim // tn),
            in_specs=[
                pl.BlockSpec((tm, K), lambda i, j: (i, 0)),
                pl.BlockSpec((tn, K), lambda i, j, off=n_off: (off + j, 0)),
                pl.BlockSpec((1, tn), lambda i, j: (0, j)),
            ],
            out_specs=pl.BlockSpec((tm, tn), lambda i, j: (i, j)),
            compiler_params=pltpu.CompilerParams(
                dimension_semantics=("parallel", "parallel"),
                vmem_limit_bytes=vmem),
        )(x, w, bias2)

    tk = _pick_tile(K, tile_k, lane=True)
    return pl.pallas_call(
        _linear_acc_kernel,
        out_shape=jax.ShapeDtypeStruct((M, out_dim), out_dtype),
        grid=(M // tm, out_dim // tn, K // tk),
        in_specs=[
            pl.BlockSpec((tm, tk), lambda i, j, k: (i, k)),
            pl.BlockSpec((tn, tk), lambda i, j, k, off=n_off: (off + j, k)),
            pl.BlockSpec((1, tn), lambda i, j, k: (0, j)),
        ],
        out_specs=pl.BlockSpec((tm, tn), lambda i, j, k: (i, j)),
        scratch_shapes=[pltpu.VMEM((tm, tn), jnp.float32)],
        compiler_params=pltpu.CompilerParams(
            dimension_semantics=("parallel", "parallel", "arbitrary"),
            vmem_limit_bytes=vmem),
    )(x, w, bias2)


# ---------------------------------------------------------------------------
# Flash-style attention: grid over (batch, q_tiles, kv_tiles), lane-dense blocks
# ---------------------------------------------------------------------------

def _attn_kernel(q_ref, k_ref, v_ref, o_ref, m_ref, l_ref, acc_ref, *, num_heads):
    ki = pl.program_id(2)
    _, tq, E = q_ref.shape
    dh = E // num_heads

    @pl.when(ki == 0)
    def _init():
        m_ref[...] = jnp.full(m_ref.shape, -jnp.inf, m_ref.dtype)
        l_ref[...] = jnp.zeros(l_ref.shape, l_ref.dtype)
        acc_ref[...] = jnp.zeros(acc_ref.shape, acc_ref.dtype)

    # Static unroll over heads ONLY (batch is a grid axis, so the trip count is
    # small).  Static column slices keep lane offsets compile-time constants
    # (no dynamic lane-dim slicing), and each (tq, dh) slab is loaded on demand
    # rather than materializing the whole (tq, E) tile into vregs.
    for h in range(num_heads):
        cols = slice(h * dh, (h + 1) * dh)
        q = q_ref[0, :, cols]                        # (tq, dh) bf16, pre-scaled
        k = k_ref[0, :, cols]                        # (tk, dh) bf16
        v = v_ref[0, :, cols]                        # (tk, dh) bf16

        # Scores: q already carries the 1/sqrt(dh) factor -> no (tq, tk) scaling.
        s = lax.dot_general(                         # (tq, tk) fp32 on MXU
            q, k, dimension_numbers=(((1,), (1,)), ((), ())),
            preferred_element_type=jnp.float32)

        m_prev = m_ref[:, cols]                      # (tq, dh), lane-replicated
        m_new = jnp.maximum(m_prev, jnp.max(s, axis=-1, keepdims=True))
        alpha = jnp.exp(m_prev - m_new)              # (tq, dh)
        p = jnp.exp(s - m_new[:, :1])                # (tq, tk)
        l_ref[:, cols] = alpha * l_ref[:, cols] + jnp.sum(p, axis=-1, keepdims=True)
        acc_ref[:, cols] = alpha * acc_ref[:, cols] + lax.dot_general(
            p.astype(v.dtype), v,                    # bf16 x bf16 -> f32 on MXU
            dimension_numbers=(((1,), (0,)), ((), ())),
            preferred_element_type=jnp.float32)
        m_ref[:, cols] = m_new

    @pl.when(ki == pl.num_programs(2) - 1)
    def _finalize():
        # Single lane-dense (tq, E) normalized store; l_ref is replicated across
        # each head's dh-wide lane band, so one full-width multiply suffices.
        # approx reciprocal runs on the EUP slot, essentially free.
        o_ref[0] = (acc_ref[...] * pl.reciprocal(l_ref[...], approx=True)
                    ).astype(o_ref.dtype)


def _attention(q, k, v, num_heads, *, tile_q=256, tile_kv=256, out_dtype=jnp.float32):
    """q: (bsz, Sq, E), k/v: (bsz, Sk, E) -> (bsz, Sq, E).

    q is expected to already carry the 1/sqrt(head_dim) softmax scale.
    """
    bsz, Sq, E = q.shape
    Sk = k.shape[1]
    tq = _pick_tile(Sq, tile_q)
    tk = _pick_tile(Sk, tile_kv)

    kernel = functools.partial(_attn_kernel, num_heads=num_heads)
    return pl.pallas_call(
        kernel,
        out_shape=jax.ShapeDtypeStruct((bsz, Sq, E), out_dtype),
        grid=(bsz, Sq // tq, Sk // tk),
        in_specs=[
            pl.BlockSpec((1, tq, E), lambda b, qi, ki: (b, qi, 0)),
            pl.BlockSpec((1, tk, E), lambda b, qi, ki: (b, ki, 0)),
            pl.BlockSpec((1, tk, E), lambda b, qi, ki: (b, ki, 0)),
        ],
        out_specs=pl.BlockSpec((1, tq, E), lambda b, qi, ki: (b, qi, 0)),
        scratch_shapes=[
            pltpu.VMEM((tq, E), jnp.float32),   # running max  (per-head lane bands)
            pltpu.VMEM((tq, E), jnp.float32),   # running sum
            pltpu.VMEM((tq, E), jnp.float32),   # running numerator
        ],
        compiler_params=pltpu.CompilerParams(
            dimension_semantics=("parallel", "parallel", "arbitrary"),
            vmem_limit_bytes=_vmem_limit_bytes()),
    )(q, k, v)


# ---------------------------------------------------------------------------
# MultiheadAttention forward
# ---------------------------------------------------------------------------

def multihead_attention_forward(query, key, value, params, num_heads, *,
                                tile_m=512, tile_n=512, tile_k=None,
                                tile_q=256, tile_kv=256,
                                attn_dtype=jnp.bfloat16):
    """query: (tgt, bsz, E), key/value: (src, bsz, E). Returns (tgt, bsz, E)."""
    in_w, in_b, out_w, out_b = params
    tgt_len, bsz, E = query.shape
    src_len = key.shape[0]
    head_dim = E // num_heads
    assert head_dim * num_heads == E
    scale = 1.0 / math.sqrt(head_dim)

    lin = functools.partial(_linear, tile_m=tile_m, tile_n=tile_n, tile_k=tile_k)

    # Packed in-projection (F._in_projection_packed).  The (3E, E) weight is
    # passed untouched; each band is selected via the BlockSpec index_map.
    # q/k/v are emitted in bf16 to halve HBM traffic and attention VMEM.
    if (query is key) and (key is value):
        # Self-attention: single fused projection (activation read from HBM once).
        qkv = lin(query.reshape(tgt_len * bsz, E), in_w, in_b,
                  out_dim=3 * E, w_row_offset=0, out_dtype=attn_dtype)
        q2, k2, v2 = qkv[:, :E], qkv[:, E:2 * E], qkv[:, 2 * E:]
    else:
        # TODO(synk): add the key-is-value fused (2E) path used by torch encoders.
        q2 = lin(query.reshape(tgt_len * bsz, E), in_w, in_b[:E],
                 out_dim=E, w_row_offset=0, out_dtype=attn_dtype)
        k2 = lin(key.reshape(src_len * bsz, E), in_w, in_b[E:2 * E],
                 out_dim=E, w_row_offset=E, out_dtype=attn_dtype)
        v2 = lin(value.reshape(src_len * bsz, E), in_w, in_b[2 * E:],
                 out_dim=E, w_row_offset=2 * E, out_dtype=attn_dtype)

    # Batch-leading relayout for the attention kernel.  These are single
    # mem-bound passes over small bf16 activations; the 1/sqrt(dh) softmax
    # scale is folded into q here (fuses with the relayout, so the attention
    # kernel never scales the (tq, tk) score matrix).
    qb = jnp.transpose(q2.reshape(tgt_len, bsz, E), (1, 0, 2)) * scale
    kb = jnp.transpose(k2.reshape(src_len, bsz, E), (1, 0, 2))
    vb = jnp.transpose(v2.reshape(src_len, bsz, E), (1, 0, 2))

    ob = _attention(qb, kb, vb, num_heads, tile_q=tile_q, tile_kv=tile_kv,
                    out_dtype=query.dtype)                     # (bsz, tgt, E)

    # Back to torch's (tgt, bsz, E) row order == permute(2,0,1,3).view(tgt*bsz, E)
    # for the out-projection.
    o = jnp.transpose(ob, (1, 0, 2)).reshape(tgt_len * bsz, E)
    out = lin(o, out_w, out_b, out_dim=E, w_row_offset=0, out_dtype=query.dtype)
    return out.reshape(tgt_len, bsz, E)


# ---------------------------------------------------------------------------
# Parameter init (mirrors torch _reset_parameters shapes/rules, deterministic)
# ---------------------------------------------------------------------------

def init_params(key, embed_dim):
    E = embed_dim
    k1, k2 = jax.random.split(key)
    a_in = math.sqrt(6.0 / (E + 3 * E))                 # xavier_uniform on (3E, E)
    in_proj_weight = jax.random.uniform(k1, (3 * E, E), jnp.float32, -a_in, a_in)
    in_proj_bias = jnp.zeros((3 * E,), jnp.float32)
    a_out = math.sqrt(6.0 / (E + E))
    out_proj_weight = jax.random.uniform(k2, (E, E), jnp.float32, -a_out, a_out)
    out_proj_bias = jnp.zeros((E,), jnp.float32)
    return in_proj_weight, in_proj_bias, out_proj_weight, out_proj_bias


# ---------------------------------------------------------------------------
# Pure-JAX reference (fp32, HIGHEST matmul precision) for correctness check
# ---------------------------------------------------------------------------

def reference_forward(query, key, value, params, num_heads):
    in_w, in_b, out_w, out_b = params
    P = lax.Precision.HIGHEST
    tgt_len, bsz, E = query.shape
    src_len = key.shape[0]
    hd = E // num_heads
    q = jnp.einsum('sbe,fe->sbf', query, in_w[:E], precision=P) + in_b[:E]
    k = jnp.einsum('sbe,fe->sbf', key, in_w[E:2 * E], precision=P) + in_b[E:2 * E]
    v = jnp.einsum('sbe,fe->sbf', value, in_w[2 * E:], precision=P) + in_b[2 * E:]
    q = q.reshape(tgt_len, bsz * num_heads, hd).transpose(1, 0, 2)
    k = k.reshape(src_len, bsz * num_heads, hd).transpose(1, 0, 2)
    v = v.reshape(src_len, bsz * num_heads, hd).transpose(1, 0, 2)
    s = jnp.einsum('bqd,bkd->bqk', q, k, precision=P) / math.sqrt(hd)
    p = jax.nn.softmax(s, axis=-1)
    o = jnp.einsum('bqk,bkd->bqd', p, v, precision=P)
    o = (o.reshape(bsz, num_heads, tgt_len, hd)
           .transpose(2, 0, 1, 3)
           .reshape(tgt_len * bsz, E))
    out = jnp.einsum('me,fe->mf', o, out_w, precision=P) + out_b
    return out.reshape(tgt_len, bsz, E)


# ---------------------------------------------------------------------------

def _run_case(name, *, embed_dim, num_heads, tgt_len, src_len, bsz,
              self_attn=False, **tiles):
    root = jax.random.PRNGKey(0)
    kq, kk, kv, kp = jax.random.split(root, 4)
    params = init_params(kp, embed_dim)

    if self_attn:
        x = jax.random.normal(kq, (tgt_len, bsz, embed_dim), jnp.float32)
        query = key = value = x           # triggers the fused 3E projection path
    else:
        query = jax.random.normal(kq, (tgt_len, bsz, embed_dim), jnp.float32)
        key = jax.random.normal(kk, (src_len, bsz, embed_dim), jnp.float32)
        value = jax.random.normal(kv, (src_len, bsz, embed_dim), jnp.float32)

    out = multihead_attention_forward(query, key, value, params, num_heads, **tiles)
    out = jax.block_until_ready(out)

    ref = reference_forward(query, key, value, params, num_heads)
    assert out.shape == (tgt_len, bsz, embed_dim)
    err = jnp.max(jnp.abs(out - ref))
    # Tolerance covers the bf16 q/k/v data path and the approx EUP reciprocal;
    # typical agreement is far tighter.
    assert jnp.allclose(out, ref, atol=2e-2, rtol=2e-2), f"{name}: max err {err}"


if __name__ == "__main__":
    # Small shapes consistent with the torch module (batch_first=False layout).
    _run_case("small-cross", embed_dim=32, num_heads=4,
              tgt_len=8, src_len=8, bsz=2)
    # Exercises the tiled/pipelined paths: K-tiled accumulator projections and
    # multi-tile flash accumulation in attention (grid over batch + q + kv).
    _run_case("tiled-cross", embed_dim=256, num_heads=8,
              tgt_len=128, src_len=128, bsz=2,
              tile_k=128, tile_q=64, tile_kv=64)
    # Self-attention: exercises the fused 3E in-projection path.
    _run_case("self-fused", embed_dim=256, num_heads=8,
              tgt_len=128, src_len=128, bsz=2, self_attn=True)
    print("KERNEL_OK")
</pallas_src>

<mosaic_0001>
module attributes {stable_mosaic.version = 11 : i64} {
  func.func @_linear_flat_kernel(%arg0: i32, %arg1: i32, %arg2: memref<16x32xf32, #tpu.memory_space<vmem>>, %arg3: memref<32x32xf32, #tpu.memory_space<vmem>>, %arg4: memref<1x32xf32, #tpu.memory_space<vmem>>, %arg5: memref<16x32xbf16, #tpu.memory_space<vmem>>) attributes {dimension_semantics = [#tpu.dimension_semantics<parallel>, #tpu.dimension_semantics<parallel>], iteration_bounds = array<i64: 1, 1>, scalar_prefetch = 0 : i64, scratch_operands = 0 : i64, tpu.core_type = #tpu.core_type<tc>, window_params = [{transform_indices = @transform_0, window_bounds = array<i64: 16, 32>}, {transform_indices = @transform_1, window_bounds = array<i64: 32, 32>}, {transform_indices = @transform_2, window_bounds = array<i64: 1, 32>}, {transform_indices = @transform_3, window_bounds = array<i64: 16, 32>}]} {
    %c0 = arith.constant 0 : index
    %c0_0 = arith.constant 0 : index
    %0 = vector.load %arg2[%c0, %c0_0] : memref<16x32xf32, #tpu.memory_space<vmem>>, vector<16x32xf32>
    %c0_1 = arith.constant 0 : index
    %c0_2 = arith.constant 0 : index
    %1 = vector.load %arg3[%c0_1, %c0_2] : memref<32x32xf32, #tpu.memory_space<vmem>>, vector<32x32xf32>
    %cst = arith.constant dense<0.000000e+00> : vector<16x32xf32>
    %2 = tpu.matmul %0, %1, %cst {dimension_numbers = #tpu.dot_dimension_numbers<[1], [1], [0], [0], [0, 0, 1, 0], [], []>} : vector<16x32xf32>, vector<32x32xf32>, vector<16x32xf32> -> vector<16x32xf32>
    %c0_3 = arith.constant 0 : index
    %c0_4 = arith.constant 0 : index
    %3 = vector.load %arg4[%c0_3, %c0_4] : memref<1x32xf32, #tpu.memory_space<vmem>>, vector<1x32xf32>
    %4 = vector.broadcast %3 : vector<1x32xf32> to vector<16x32xf32>
    %5 = arith.addf %2, %4 : vector<16x32xf32>
    %6 = arith.truncf %5 : vector<16x32xf32> to vector<16x32xbf16>
    %c0_5 = arith.constant 0 : index
    %c0_6 = arith.constant 0 : index
    %7 = vector.load %arg5[%c0_5, %c0_6] : memref<16x32xbf16, #tpu.memory_space<vmem>>, vector<16x32xbf16>
    tpu.vector_store %arg5[%c0_5, %c0_6], %6 {strides = array<i32>} : memref<16x32xbf16, #tpu.memory_space<vmem>>, vector<16x32xbf16>,
    return
  }
  func.func @transform_0(%arg0: i32, %arg1: i32) -> (i32, i32) {
    %c0_i32 = arith.constant 0 : i32
    %c0_i32_0 = arith.constant 0 : i32
    return %arg0, %c0_i32 : i32, i32
  }
  func.func @transform_1(%arg0: i32, %arg1: i32) -> (i32, i32) {
    %c0_i32 = arith.constant 0 : i32
    %0 = arith.addi %c0_i32, %arg1 : i32
    %c0_i32_0 = arith.constant 0 : i32
    %c0_i32_1 = arith.constant 0 : i32
    return %0, %c0_i32_0 : i32, i32
  }
  func.func @transform_2(%arg0: i32, %arg1: i32) -> (i32, i32) {
    %c0_i32 = arith.constant 0 : i32
    %c0_i32_0 = arith.constant 0 : i32
    return %c0_i32, %arg1 : i32, i32
  }
  func.func @transform_3(%arg0: i32, %arg1: i32) -> (i32, i32) {
    %c0_i32 = arith.constant 0 : i32
    return %arg0, %arg1 : i32, i32
  }
}

</mosaic_0001>

<llo_original>
// kernel: tpu_custom_call.1
$region0: #{tpu_custom_call.1}
  #allocation0 [shape = 'u32[]', space=smem, size = 0x4, offset = 0x4, fixed_abs, tag = 'smem constant byte address 0x4 - core index']
  #allocation1 [shape = 'u32[72,128]{1,0:T(1,128)}', space=vmem, size = 0x9000, scoped, tag = 'internal scratch']
  %s0 = inlined_call_operand.vmem [shape: f32[16,32], index: 0, kind: input, shape index: {}]
  %s1 = inlined_call_operand.vmem [shape: f32[96,32], index: 1, kind: input, shape index: {}]
  %s2 = inlined_call_operand.vmem [shape: f32[1,32], index: 2, kind: input, shape index: {}]
  %s3 = inlined_call_operand.hbm [shape: bf16[16,32], index: 3, kind: output, shape index: {}]
  %s4 = sld [smem:[#allocation0]]
  $region22: #{tpu_custom_call.1} parent=0
    _
  %s6 = ssub.s32 1, %s4
  %s7 = scalar_select 0, %s6, %s4
  $region1: #{tpu_custom_call.1} parent=0
    #allocation2 [shape = 'u8[4096]{0}', space=vmem, size = 0x1000, scoped, tag = 'output window, operand 0, single buffered']
    #allocation3 [shape = 's32[1]{0}', space=sflag, size = 0x4, scoped, tag = 'scoped memory for tpu_custom_call.1']
    %8 = vsyncpa [#allocation3], 0
    // Predicated region
    $region2: #{tpu_custom_call.1} parent=1 // pred_check
      _
    $region3: #{tpu_custom_call.1} parent=1 // pred_check_branch
      %10 = sbr.rel (0) target = $region5
    $region4: #{tpu_custom_call.1} parent=1 // pred_region
      _
    $region5: #{tpu_custom_call.1} parent=1 // pred_fallthru
      _
    // Predicated region
    $region6: #{tpu_custom_call.1} parent=1 // pred_check
      _
    $region7: #{tpu_custom_call.1} parent=1 // pred_check_branch
      %12 = sbr.rel (0) target = $region9
    $region8: #{tpu_custom_call.1} parent=1 // pred_region
      _
    $region9: #{tpu_custom_call.1} parent=1 // pred_fallthru
      _
    // Predicated region
    $region10: #{tpu_custom_call.1} parent=1 // pred_check
      _
    $region11: #{tpu_custom_call.1} parent=1 // pred_check_branch
      %14 = sbr.rel (0) target = $region13
    $region12: #{tpu_custom_call.1} parent=1 // pred_region
      _
    $region13: #{tpu_custom_call.1} parent=1 // pred_fallthru
      _
    %v15 = vld [vmem:[%s0] sm:$0xff]
    %v16 = vld [vmem:[%s0 + $0x8] sm:$0xff]
    %v17 = vld [vmem:[%s1] sm:$0xff]
    %v18 = vld [vmem:[%s1 + $0x8] sm:$0xff]
    %v19 = vld [vmem:[%s1 + $0x10] sm:$0xff]
    %v20 = vld [vmem:[%s1 + $0x18] sm:$0xff]
    %v21 = vld [vmem:[%s2] sm:$0x1]
    %v23 = vperm.slane %v21, 0
    %vm25 = vcmask 261120
    %v27 = vsel %vm25, %v15, 0
    %v30 = vsel %vm25, %v16, 0
    %v33 = vsel %vm25, %v17, 0
    %v36 = vsel %vm25, %v18, 0
    %v39 = vsel %vm25, %v19, 0
    %v42 = vsel %vm25, %v20, 0
    %44 = vmatpush.xpose.msra.mxu0 0.0
    %45 = vmatpush.xpose.msra.mxu0 0.0
    %46 = vmatpush.xpose.msra.mxu0 0.0
    %47 = vmatpush.xpose.msra.mxu0 0.0
    %48 = vmatpush.xpose.msra.mxu0 0.0
    %49 = vmatpush.xpose.msra.mxu0 0.0
    %50 = vmatpush.xpose.msra.mxu0 0.0
    %51 = vmatpush.xpose.msra.mxu0 0.0
    %52 = vmatpush.xpose.msra.mxu0 0.0
    %53 = vmatpush.xpose.msra.mxu0 0.0
    %54 = vmatpush.xpose.msra.mxu0 0.0
    %55 = vmatpush.xpose.msra.mxu0 0.0
    %56 = vmatpush.xpose.msra.mxu0 %v42
    %57 = vmatpush.xpose.msra.mxu0 %v39
    %58 = vmatpush.xpose.msra.mxu0 %v36
    %59 = vmatpush.xpose.msra.mxu0 %v33
    %60 = vmatmul.f32.gmra.mxu0 %v27
    %v61 = vpop.f32.mrf.mxu0
    %v62 = vadd.f32 %v23, %v61
    %63 = vmatmul.f32.gmra.mxu0 %v30
    %v64 = vpop.f32.mrf.mxu0
    %v65 = vadd.f32 %v23, %v64
    %66 = vdwg.mxu0
    %v67 = vpack.c.bf16 %v62, %v62
    %v68 = vpack.c.bf16 %v65, %v65
    %vm69 = vcmask 257024
    %70 = vst.msk [vmem:[#allocation2] sm:$0xf] %vm69, %v67
    %71 = vst.msk [vmem:[#allocation2 + $0x4] sm:$0xf] %vm69, %v68
    // Predicated region
    $region14: #{tpu_custom_call.1} parent=1 // pred_check
      _
    $region15: #{tpu_custom_call.1} parent=1 // pred_check_branch
      %73 = sbr.rel (0) target = $region17
    $region16: #{tpu_custom_call.1} parent=1 // pred_region
      %75 = vsyncadd [#allocation3], 0
      %s76 = sshll.u32 [#allocation2], 4
      %s77 = int_to_ptr.vmem [resolvable:$true] %s76
      %s78 = sshll.u32 %s3, 4
      %s79 = int_to_ptr.hbm [resolvable:$true] %s78
      %84 = dma.vmem_to_hbm [thread:$0]  %s77, 128, %s79, [#allocation3], 64, 64, 4
    $region17: #{tpu_custom_call.1} parent=1 // pred_fallthru
      _
    // Predicated region
    $region18: #{tpu_custom_call.1} parent=1 // pred_check
      _
    $region19: #{tpu_custom_call.1} parent=1 // pred_check_branch
      %86 = sbr.rel (0) target = $region21
    $region20: #{tpu_custom_call.1} parent=1 // pred_region
      %88 = dma.done [#allocation3], 128
    $region21: #{tpu_custom_call.1} parent=1 // pred_fallthru
      _
    %89 = vsyncpa [#allocation3], 1

</llo_original>
